<compile_context>
chip_gen: v7x
topology: tpu7x:2x2x1
jax: 0.10.0
libtpu: 0.0.40
codegen_flags: <defaults>
</compile_context>

<pallas_src>
import functools

import jax
import jax.numpy as jnp
from jax.experimental import pallas as pl
from jax.experimental.pallas import tpu as pltpu


def _round_up(x, m):
    return (x + m - 1) // m * m


def _cdiv(a, b):
    return (a + b - 1) // b


def _pad_to(a, shape):
    pads = [(0, s - d) for d, s in zip(a.shape, shape)]
    if any(p[1] for p in pads):
        a = jnp.pad(a, pads)
    return a


def _new_gelu(h):
    c = 0.7978845608028654  # sqrt(2/pi)
    return 0.5 * h * (1.0 + jnp.tanh(c * (h + 0.044715 * h * h * h)))


def _residual_layernorm(z, x_f32, gamma_ref, beta_ref, *, ln_eps, d_actual, masked):
    """z: FFN output (+b2) in f32.  Adds residual and LayerNorms over the true D."""
    z = z + x_f32                                   # dropout(eval) = identity
    if masked:
        lane = jax.lax.broadcasted_iota(jnp.int32, z.shape, 1)
        valid = lane < d_actual
        z = jnp.where(valid, z, 0.0)
    inv_d = 1.0 / d_actual
    mean = jnp.sum(z, axis=-1, keepdims=True) * inv_d
    zc = z - mean
    if masked:
        zc = jnp.where(valid, zc, 0.0)
    var = jnp.sum(zc * zc, axis=-1, keepdims=True) * inv_d
    zn = zc * jax.lax.rsqrt(var + ln_eps)
    return (zn * gamma_ref[...].astype(jnp.float32)
            + beta_ref[...].astype(jnp.float32))


# ---------------------------------------------------------------------------
# Kernel bodies
# ---------------------------------------------------------------------------
def _ffn_kernel_resident(x_ref, w1_ref, b1_ref, w2_ref, b2_ref, gamma_ref,
                         beta_ref, o_ref, *, ln_eps, d_actual, masked):
    # Weights are fully VMEM-resident (constant block index -> single DMA).
    h = jnp.dot(x_ref[...], w1_ref[...], preferred_element_type=jnp.float32)
    h = _new_gelu(h + b1_ref[...].astype(jnp.float32))
    y = jnp.dot(h.astype(w2_ref.dtype), w2_ref[...],
                preferred_element_type=jnp.float32)
    z = y + b2_ref[...].astype(jnp.float32)
    out = _residual_layernorm(z, x_ref[...].astype(jnp.float32),
                              gamma_ref, beta_ref, ln_eps=ln_eps,
                              d_actual=d_actual, masked=masked)
    o_ref[...] = out.astype(o_ref.dtype)


def _ffn_kernel_acc(x_ref, w1_ref, b1_ref, w2_ref, b2_ref, gamma_ref, beta_ref,
                    o_ref, acc_ref, *, ln_eps, d_actual, masked):
    # Hidden dim tiled on a trailing "arbitrary" grid axis; f32 accumulator.
    h_idx = pl.program_id(1)

    @pl.when(h_idx == 0)
    def _():
        acc_ref[...] = jnp.zeros_like(acc_ref)

    h = jnp.dot(x_ref[...], w1_ref[...], preferred_element_type=jnp.float32)
    h = _new_gelu(h + b1_ref[...].astype(jnp.float32))
    acc_ref[...] += jnp.dot(h.astype(w2_ref.dtype), w2_ref[...],
                            preferred_element_type=jnp.float32)

    @pl.when(h_idx == pl.num_programs(1) - 1)
    def _():
        z = acc_ref[...] + b2_ref[...].astype(jnp.float32)
        out = _residual_layernorm(z, x_ref[...].astype(jnp.float32),
                                  gamma_ref, beta_ref, ln_eps=ln_eps,
                                  d_actual=d_actual, masked=masked)
        o_ref[...] = out.astype(o_ref.dtype)


# ---------------------------------------------------------------------------
# Wrapper
# ---------------------------------------------------------------------------
def _vmem_budget_bytes():
    cap = 64 * 1024 * 1024            # assume smallest (v7x per-TC) if query fails
    try:
        cap = int(pltpu.get_tpu_info().vmem_capacity_bytes)
    except Exception:
        pass
    # Leave ~25% headroom for Mosaic internal scratch / pipeline bookkeeping.
    return min((cap * 3) // 4, 96 * 1024 * 1024)


def feed_forward(x, w1, b1, w2, b2, gamma, beta, *, ln_eps=1e-5,
                 tile_rows_max=1024, tile_h_max=1024, mxu_dtype=None,
                 force_accumulate=False):
    """x: [B, T, D] -> [B, T, D].  Fused FFN + residual + LayerNorm (eval mode)."""
    B, T, D = x.shape
    H = w1.shape[1]
    assert w2.shape == (H, D), "residual + LayerNorm require output_dim == input_dim"
    rows = B * T

    # Optional reduced-precision MXU feed (recommended on v5e for f32 models).
    if mxu_dtype is not None:
        x = x.astype(mxu_dtype)
        w1 = w1.astype(mxu_dtype)
        w2 = w2.astype(mxu_dtype)

    x_is = jnp.dtype(x.dtype).itemsize
    w_is = jnp.dtype(w1.dtype).itemsize

    D_pad = _round_up(D, 128)
    H_pad = _round_up(H, 128)
    masked = (D != D_pad)

    budget = _vmem_budget_bytes()

    # ---- choose path + hidden tiling --------------------------------------
    weight_bytes = 2 * D_pad * H_pad * w_is
    resident = (weight_bytes <= budget // 3) and not force_accumulate

    if resident:
        tile_h, n_h = H_pad, 1
        fixed = 2 * weight_bytes + 4 * (H_pad + 3 * D_pad)
        per_row = 4 * D_pad * x_is + 8 * H_pad + 8 * D_pad
    else:
        # Double-buffered weight tiles stay within ~1/3 of the budget; tile_h
        # must exactly divide H_pad so no hidden-dim work is wasted.
        cap = max(128, min(tile_h_max,
                           ((budget // 3) // (4 * D_pad * w_is)) // 128 * 128))
        n128 = H_pad // 128
        tile_h = 128
        for k in range(1, n128 + 1):
            if n128 % k == 0 and (n128 // k) * 128 <= cap:
                tile_h = (n128 // k) * 128
                break
        n_h = H_pad // tile_h
        fixed = 4 * D_pad * tile_h * w_is + 4 * (tile_h + 3 * D_pad)
        per_row = 4 * D_pad * x_is + 4 * D_pad + 8 * tile_h + 8 * D_pad

    # ---- row tiling (budget-driven, balanced, even tile count) ------------
    row_align = 8 if x_is >= 4 else 16
    fit = max(row_align, (budget - fixed) // per_row)
    tile_rows = max(row_align, min(tile_rows_max, (fit // row_align) * row_align))
    num_row_tiles = _cdiv(rows, tile_rows)
    if num_row_tiles == 1 and rows >= 2 * row_align:
        num_row_tiles = 2                 # keep both v7x TensorCores busy
    elif num_row_tiles > 1 and num_row_tiles % 2 == 1:
        num_row_tiles += 1                # even wave across the two cores
    tile_rows = _round_up(_cdiv(rows, num_row_tiles), row_align)
    rows_pad = num_row_tiles * tile_rows

    est = fixed + per_row * tile_rows
    vmem_limit = int(min(max(32 * 1024 * 1024, int(1.4 * est)), budget))

    # ---- zero-pad operands (zero padding is exactly neutral for this FFN) --
    x2 = _pad_to(x.reshape(rows, D), (rows_pad, D_pad))
    w1p = _pad_to(w1, (D_pad, H_pad))
    b1p = _pad_to(b1.reshape(1, H), (1, H_pad))
    w2p = _pad_to(w2, (H_pad, D_pad))
    b2p = _pad_to(b2.reshape(1, D), (1, D_pad))
    gp = _pad_to(gamma.reshape(1, D), (1, D_pad))
    btp = _pad_to(beta.reshape(1, D), (1, D_pad))

    weight_streams = 1 if resident else num_row_tiles
    cost = pl.CostEstimate(
        flops=4 * rows_pad * D_pad * H_pad,
        transcendentals=rows_pad * H_pad,
        bytes_accessed=int(2 * rows_pad * D_pad * x_is
                           + weight_streams * 2 * D_pad * H_pad * w_is),
    )

    if resident:
        kernel = functools.partial(_ffn_kernel_resident, ln_eps=ln_eps,
                                   d_actual=D, masked=masked)
        out2 = pl.pallas_call(
            kernel,
            out_shape=jax.ShapeDtypeStruct((rows_pad, D_pad), x.dtype),
            grid_spec=pltpu.PrefetchScalarGridSpec(
                num_scalar_prefetch=0,
                grid=(num_row_tiles,),
                in_specs=[
                    pl.BlockSpec((tile_rows, D_pad), lambda i: (i, 0)),  # x
                    pl.BlockSpec((D_pad, H_pad), lambda i: (0, 0)),      # w1 (resident)
                    pl.BlockSpec((1, H_pad), lambda i: (0, 0)),          # b1
                    pl.BlockSpec((H_pad, D_pad), lambda i: (0, 0)),      # w2 (resident)
                    pl.BlockSpec((1, D_pad), lambda i: (0, 0)),          # b2
                    pl.BlockSpec((1, D_pad), lambda i: (0, 0)),          # gamma
                    pl.BlockSpec((1, D_pad), lambda i: (0, 0)),          # beta
                ],
                out_specs=pl.BlockSpec((tile_rows, D_pad), lambda i: (i, 0)),
            ),
            compiler_params=pltpu.CompilerParams(
                dimension_semantics=("parallel",),
                vmem_limit_bytes=vmem_limit),
            cost_estimate=cost,
        )(x2, w1p, b1p, w2p, b2p, gp, btp)
    else:
        kernel = functools.partial(_ffn_kernel_acc, ln_eps=ln_eps,
                                   d_actual=D, masked=masked)
        out2 = pl.pallas_call(
            kernel,
            out_shape=jax.ShapeDtypeStruct((rows_pad, D_pad), x.dtype),
            grid_spec=pltpu.PrefetchScalarGridSpec(
                num_scalar_prefetch=0,
                grid=(num_row_tiles, n_h),
                in_specs=[
                    pl.BlockSpec((tile_rows, D_pad), lambda i, h: (i, 0)),  # x
                    pl.BlockSpec((D_pad, tile_h), lambda i, h: (0, h)),     # w1
                    pl.BlockSpec((1, tile_h), lambda i, h: (0, h)),         # b1
                    pl.BlockSpec((tile_h, D_pad), lambda i, h: (h, 0)),     # w2
                    pl.BlockSpec((1, D_pad), lambda i, h: (0, 0)),          # b2
                    pl.BlockSpec((1, D_pad), lambda i, h: (0, 0)),          # gamma
                    pl.BlockSpec((1, D_pad), lambda i, h: (0, 0)),          # beta
                ],
                out_specs=pl.BlockSpec((tile_rows, D_pad), lambda i, h: (i, 0)),
                scratch_shapes=[pltpu.VMEM((tile_rows, D_pad), jnp.float32)],
            ),
            compiler_params=pltpu.CompilerParams(
                dimension_semantics=("parallel", "arbitrary"),
                vmem_limit_bytes=vmem_limit),
            cost_estimate=cost,
        )(x2, w1p, b1p, w2p, b2p, gp, btp)

    if rows_pad != rows or D_pad != D:
        out2 = out2[:rows, :D]
    return out2.reshape(B, T, D)


# ---------------------------------------------------------------------------
# Self-test
# ---------------------------------------------------------------------------
def _reference(x, w1, b1, w2, b2, gamma, beta, eps=1e-5):
    h = x @ w1 + b1
    c = 0.7978845608028654
    h = 0.5 * h * (1.0 + jnp.tanh(c * (h + 0.044715 * h ** 3)))
    y = h @ w2 + b2
    z = y + x
    mu = z.mean(-1, keepdims=True)
    var = ((z - mu) ** 2).mean(-1, keepdims=True)
    return (z - mu) / jnp.sqrt(var + eps) * gamma + beta


def _make_params(key, D, H):
    kw1, kb1, kw2, kb2, kg, kb = jax.random.split(key, 6)
    bound1 = 1.0 / (D ** 0.5)
    w1 = jax.random.uniform(kw1, (D, H), jnp.float32, -bound1, bound1)
    b1 = jax.random.uniform(kb1, (H,), jnp.float32, -bound1, bound1)
    bound2 = 1.0 / (H ** 0.5)
    w2 = jax.random.uniform(kw2, (H, D), jnp.float32, -bound2, bound2)
    b2 = jax.random.uniform(kb2, (D,), jnp.float32, -bound2, bound2)
    gamma = 1.0 + 0.1 * jax.random.normal(kg, (D,), jnp.float32)
    beta = 0.1 * jax.random.normal(kb, (D,), jnp.float32)
    return w1, b1, w2, b2, gamma, beta


if __name__ == "__main__":
    key = jax.random.PRNGKey(0)
    k1, k2, k3, k4 = jax.random.split(key, 4)

    # --- test 1: module defaults (n_layer=1, D=32, forward_expansion=1) -----
    # exercises the weights-resident fast path.
    B, T, D = 2, 8, 32
    H = 1 * D
    x = jax.random.normal(k1, (B, T, D), dtype=jnp.float32)
    params = _make_params(k2, D, H)
    out = jax.block_until_ready(feed_forward(x, *params))
    ref = _reference(x, *params)
    assert jnp.allclose(out, ref, atol=1e-4, rtol=1e-4), "fast path mismatch"

    # --- test 2: forces the hidden-dim accumulator path (multiple H steps) --
    B2, T2, D2 = 2, 24, 64
    H2 = 4 * D2
    x2 = jax.random.normal(k3, (B2, T2, D2), dtype=jnp.float32)
    params2 = _make_params(k4, D2, H2)
    out2 = jax.block_until_ready(
        feed_forward(x2, *params2, force_accumulate=True, tile_h_max=128))
    ref2 = _reference(x2, *params2)
    assert jnp.allclose(out2, ref2, atol=5e-4, rtol=5e-4), "acc path mismatch"

    print("KERNEL_OK")
</pallas_src>

<mosaic_0001>
module attributes {stable_mosaic.version = 11 : i64} {
  func.func @_ffn_kernel_resident(%arg0: i32, %arg1: memref<8x128xf32, #tpu.memory_space<vmem>>, %arg2: memref<128x128xf32, #tpu.memory_space<vmem>>, %arg3: memref<1x128xf32, #tpu.memory_space<vmem>>, %arg4: memref<128x128xf32, #tpu.memory_space<vmem>>, %arg5: memref<1x128xf32, #tpu.memory_space<vmem>>, %arg6: memref<1x128xf32, #tpu.memory_space<vmem>>, %arg7: memref<1x128xf32, #tpu.memory_space<vmem>>, %arg8: memref<8x128xf32, #tpu.memory_space<vmem>>) attributes {dimension_semantics = [#tpu.dimension_semantics<parallel>], iteration_bounds = array<i64: 2>, scalar_prefetch = 0 : i64, scratch_operands = 0 : i64, tpu.core_type = #tpu.core_type<tc>, window_params = [{transform_indices = @transform_0, window_bounds = array<i64: 8, 128>}, {pipeline_mode = #tpu.pipeline_mode<synchronous>, transform_indices = @transform_1, window_bounds = array<i64: 128, 128>}, {pipeline_mode = #tpu.pipeline_mode<synchronous>, transform_indices = @transform_2, window_bounds = array<i64: 1, 128>}, {pipeline_mode = #tpu.pipeline_mode<synchronous>, transform_indices = @transform_3, window_bounds = array<i64: 128, 128>}, {pipeline_mode = #tpu.pipeline_mode<synchronous>, transform_indices = @transform_4, window_bounds = array<i64: 1, 128>}, {pipeline_mode = #tpu.pipeline_mode<synchronous>, transform_indices = @transform_5, window_bounds = array<i64: 1, 128>}, {pipeline_mode = #tpu.pipeline_mode<synchronous>, transform_indices = @transform_6, window_bounds = array<i64: 1, 128>}, {transform_indices = @transform_7, window_bounds = array<i64: 8, 128>}]} {
    %c0 = arith.constant 0 : index
    %c0_0 = arith.constant 0 : index
    %0 = vector.load %arg1[%c0, %c0_0] : memref<8x128xf32, #tpu.memory_space<vmem>>, vector<8x128xf32>
    %c0_1 = arith.constant 0 : index
    %c0_2 = arith.constant 0 : index
    %1 = vector.load %arg2[%c0_1, %c0_2] : memref<128x128xf32, #tpu.memory_space<vmem>>, vector<128x128xf32>
    %cst = arith.constant dense<0.000000e+00> : vector<8x128xf32>
    %2 = tpu.matmul %0, %1, %cst {dimension_numbers = #tpu.dot_dimension_numbers<[1], [0], [0], [1], [0, 0, 1, 1], [], []>} : vector<8x128xf32>, vector<128x128xf32>, vector<8x128xf32> -> vector<8x128xf32>
    %c0_3 = arith.constant 0 : index
    %c0_4 = arith.constant 0 : index
    %3 = vector.load %arg3[%c0_3, %c0_4] : memref<1x128xf32, #tpu.memory_space<vmem>>, vector<1x128xf32>
    %4 = vector.broadcast %3 : vector<1x128xf32> to vector<8x128xf32>
    %5 = arith.addf %2, %4 : vector<8x128xf32>
    %cst_5 = arith.constant 5.000000e-01 : f32
    %6 = vector.broadcast %cst_5 : f32 to vector<8x128xf32>
    %7 = arith.mulf %6, %5 : vector<8x128xf32>
    %cst_6 = arith.constant 4.471500e-02 : f32
    %8 = vector.broadcast %cst_6 : f32 to vector<8x128xf32>
    %9 = arith.mulf %8, %5 : vector<8x128xf32>
    %10 = arith.mulf %9, %5 : vector<8x128xf32>
    %11 = arith.mulf %10, %5 : vector<8x128xf32>
    %12 = arith.addf %5, %11 : vector<8x128xf32>
    %cst_7 = arith.constant 0.797884583 : f32
    %13 = vector.broadcast %cst_7 : f32 to vector<8x128xf32>
    %14 = arith.mulf %13, %12 : vector<8x128xf32>
    %15 = math.tanh %14 : vector<8x128xf32>
    %cst_8 = arith.constant 1.000000e+00 : f32
    %16 = vector.broadcast %cst_8 : f32 to vector<8x128xf32>
    %17 = arith.addf %16, %15 : vector<8x128xf32>
    %18 = arith.mulf %7, %17 : vector<8x128xf32>
    %c0_9 = arith.constant 0 : index
    %c0_10 = arith.constant 0 : index
    %19 = vector.load %arg4[%c0_9, %c0_10] : memref<128x128xf32, #tpu.memory_space<vmem>>, vector<128x128xf32>
    %cst_11 = arith.constant dense<0.000000e+00> : vector<8x128xf32>
    %20 = tpu.matmul %18, %19, %cst_11 {dimension_numbers = #tpu.dot_dimension_numbers<[1], [0], [0], [1], [0, 0, 1, 1], [], []>} : vector<8x128xf32>, vector<128x128xf32>, vector<8x128xf32> -> vector<8x128xf32>
    %c0_12 = arith.constant 0 : index
    %c0_13 = arith.constant 0 : index
    %21 = vector.load %arg5[%c0_12, %c0_13] : memref<1x128xf32, #tpu.memory_space<vmem>>, vector<1x128xf32>
    %22 = vector.broadcast %21 : vector<1x128xf32> to vector<8x128xf32>
    %23 = arith.addf %20, %22 : vector<8x128xf32>
    %c0_14 = arith.constant 0 : index
    %c0_15 = arith.constant 0 : index
    %24 = vector.load %arg1[%c0_14, %c0_15] : memref<8x128xf32, #tpu.memory_space<vmem>>, vector<8x128xf32>
    %25 = arith.addf %23, %24 : vector<8x128xf32>
    %26 = tpu.iota {dimensions = array<i32: 1>} : vector<8x128xi32>
    %c32_i32 = arith.constant 32 : i32
    %27 = vector.broadcast %c32_i32 : i32 to vector<8x128xi32>
    %28 = arith.cmpi slt, %26, %27 : vector<8x128xi32>
    %cst_16 = arith.constant 0.000000e+00 : f32
    %29 = vector.broadcast %cst_16 : f32 to vector<8x128xf32>
    %30 = arith.select %28, %25, %29 : vector<8x128xi1>, vector<8x128xf32>
    %cst_17 = arith.constant dense<0.000000e+00> : vector<8xf32>
    %31 = vector.multi_reduction <add>, %30, %cst_17 [1] : vector<8x128xf32> to vector<8xf32>
    %32 = vector.shape_cast %31 : vector<8xf32> to vector<8x1xf32>
    %cst_18 = arith.constant 3.125000e-02 : f32
    %33 = vector.broadcast %cst_18 : f32 to vector<8x1xf32>
    %34 = arith.mulf %32, %33 : vector<8x1xf32>
    %35 = vector.broadcast %34 : vector<8x1xf32> to vector<8x128xf32>
    %36 = arith.subf %30, %35 : vector<8x128xf32>
    %cst_19 = arith.constant 0.000000e+00 : f32
    %37 = vector.broadcast %cst_19 : f32 to vector<8x128xf32>
    %38 = arith.select %28, %36, %37 : vector<8x128xi1>, vector<8x128xf32>
    %39 = arith.mulf %38, %38 : vector<8x128xf32>
    %cst_20 = arith.constant dense<0.000000e+00> : vector<8xf32>
    %40 = vector.multi_reduction <add>, %39, %cst_20 [1] : vector<8x128xf32> to vector<8xf32>
    %41 = vector.shape_cast %40 : vector<8xf32> to vector<8x1xf32>
    %cst_21 = arith.constant 3.125000e-02 : f32
    %42 = vector.broadcast %cst_21 : f32 to vector<8x1xf32>
    %43 = arith.mulf %41, %42 : vector<8x1xf32>
    %cst_22 = arith.constant 9.99999974E-6 : f32
    %44 = vector.broadcast %cst_22 : f32 to vector<8x1xf32>
    %45 = arith.addf %43, %44 : vector<8x1xf32>
    %46 = math.rsqrt %45 : vector<8x1xf32>
    %47 = vector.broadcast %46 : vector<8x1xf32> to vector<8x128xf32>
    %48 = arith.mulf %38, %47 : vector<8x128xf32>
    %c0_23 = arith.constant 0 : index
    %c0_24 = arith.constant 0 : index
    %49 = vector.load %arg6[%c0_23, %c0_24] : memref<1x128xf32, #tpu.memory_space<vmem>>, vector<1x128xf32>
    %50 = vector.broadcast %49 : vector<1x128xf32> to vector<8x128xf32>
    %51 = arith.mulf %48, %50 : vector<8x128xf32>
    %c0_25 = arith.constant 0 : index
    %c0_26 = arith.constant 0 : index
    %52 = vector.load %arg7[%c0_25, %c0_26] : memref<1x128xf32, #tpu.memory_space<vmem>>, vector<1x128xf32>
    %53 = vector.broadcast %52 : vector<1x128xf32> to vector<8x128xf32>
    %54 = arith.addf %51, %53 : vector<8x128xf32>
    %c0_27 = arith.constant 0 : index
    %c0_28 = arith.constant 0 : index
    %55 = vector.load %arg8[%c0_27, %c0_28] : memref<8x128xf32, #tpu.memory_space<vmem>>, vector<8x128xf32>
    tpu.vector_store %arg8[%c0_27, %c0_28], %54 {strides = array<i32>} : memref<8x128xf32, #tpu.memory_space<vmem>>, vector<8x128xf32>,
    return
  }
  func.func @transform_0(%arg0: i32) -> (i32, i32) {
    %c0_i32 = arith.constant 0 : i32
    %c0_i32_0 = arith.constant 0 : i32
    return %arg0, %c0_i32 : i32, i32
  }
  func.func @transform_1(%arg0: i32) -> (i32, i32) {
    %c0_i32 = arith.constant 0 : i32
    %c0_i32_0 = arith.constant 0 : i32
    %c0_i32_1 = arith.constant 0 : i32
    return %c0_i32, %c0_i32_0 : i32, i32
  }
  func.func @transform_2(%arg0: i32) -> (i32, i32) {
    %c0_i32 = arith.constant 0 : i32
    %c0_i32_0 = arith.constant 0 : i32
    %c0_i32_1 = arith.constant 0 : i32
    return %c0_i32, %c0_i32_0 : i32, i32
  }
  func.func @transform_3(%arg0: i32) -> (i32, i32) {
    %c0_i32 = arith.constant 0 : i32
    %c0_i32_0 = arith.constant 0 : i32
    %c0_i32_1 = arith.constant 0 : i32
    return %c0_i32, %c0_i32_0 : i32, i32
  }
  func.func @transform_4(%arg0: i32) -> (i32, i32) {
    %c0_i32 = arith.constant 0 : i32
    %c0_i32_0 = arith.constant 0 : i32
    %c0_i32_1 = arith.constant 0 : i32
    return %c0_i32, %c0_i32_0 : i32, i32
  }
  func.func @transform_5(%arg0: i32) -> (i32, i32) {
    %c0_i32 = arith.constant 0 : i32
    %c0_i32_0 = arith.constant 0 : i32
    %c0_i32_1 = arith.constant 0 : i32
    return %c0_i32, %c0_i32_0 : i32, i32
  }
  func.func @transform_6(%arg0: i32) -> (i32, i32) {
    %c0_i32 = arith.constant 0 : i32
    %c0_i32_0 = arith.constant 0 : i32
    %c0_i32_1 = arith.constant 0 : i32
    return %c0_i32, %c0_i32_0 : i32, i32
  }
  func.func @transform_7(%arg0: i32) -> (i32, i32) {
    %c0_i32 = arith.constant 0 : i32
    %c0_i32_0 = arith.constant 0 : i32
    return %arg0, %c0_i32 : i32, i32
  }
}

</mosaic_0001>

<llo_original>
// kernel: tpu_custom_call.1
$region0: #{tpu_custom_call.1}
  #allocation0 [shape = 'u32[]', space=smem, size = 0x4, offset = 0x4, fixed_abs, tag = 'smem constant byte address 0x4 - core index']
  #allocation1 [shape = 'u32[144,128]{1,0:T(1,128)}', space=vmem, size = 0x12000, scoped, tag = 'internal scratch']
  %s0 = inlined_call_operand.hbm [shape: f32[16,128], index: 0, kind: input, shape index: {}]
  %s1 = inlined_call_operand.hbm [shape: f32[128,128], index: 1, kind: input, shape index: {}]
  %s2 = inlined_call_operand.vmem [shape: f32[1,128], index: 2, kind: input, shape index: {}]
  %s3 = inlined_call_operand.hbm [shape: f32[128,128], index: 3, kind: input, shape index: {}]
  %s4 = inlined_call_operand.vmem [shape: f32[1,128], index: 4, kind: input, shape index: {}]
  %s5 = inlined_call_operand.vmem [shape: f32[1,128], index: 5, kind: input, shape index: {}]
  %s6 = inlined_call_operand.vmem [shape: f32[1,128], index: 6, kind: input, shape index: {}]
  %s7 = inlined_call_operand.hbm [shape: f32[16,128], index: 7, kind: output, shape index: {}]
  %s8 = sld [smem:[#allocation0]]
  $region73: #{tpu_custom_call.1} parent=0
    _
  %s10 = ssub.s32 1, %s8
  %s11 = scalar_select 0, %s10, %s8
  $region1: #{tpu_custom_call.1} parent=0
    #allocation2 [shape = 'u8[8192]{0}', space=vmem, size = 0x2000, scoped, tag = 'input window, operand 0']
    #allocation3 [shape = 's32[2]{0}', space=sflag, size = 0x8, scoped, tag = 'scoped memory for tpu_custom_call.1']
    #allocation4 [shape = 's32[2]{0}', space=sflag, size = 0x8, scoped, tag = 'scoped memory for tpu_custom_call.1']
    #allocation5 [shape = 'u8[65536]{0}', space=vmem, size = 0x10000, scoped, tag = 'input window, operand 1, single buffered']
    #allocation6 [shape = 's32[1]{0}', space=sflag, size = 0x4, scoped, tag = 'scoped memory for tpu_custom_call.1']
    #allocation7 [shape = 'u8[65536]{0}', space=vmem, size = 0x10000, scoped, tag = 'input window, operand 3, single buffered']
    #allocation8 [shape = 'u8[8192]{0}', space=vmem, size = 0x2000, scoped, tag = 'output window, operand 0']
    %12 = vsyncpa [#allocation3], 0
    %s13 = scalar_lea.sflag [#allocation3], 1
    %14 = vsyncpa %s13, 0
    %15 = vsyncpa [#allocation6], 0
    %16 = vsyncpa [#allocation4], 0
    %s17 = scalar_lea.sflag [#allocation4], 1
    %18 = vsyncpa %s17, 0
    loop: start=0, step=1, limit=4
    $region2: #{tpu_custom_call.1} parent=1 // loop_pre_header
      _
    $region3: #{tpu_custom_call.1} parent=1 // loop_header
      %s20 = sphi 0, %s24
      %p21 = scmp.ge.s32.totalorder %s20, 4
      %s30 = sphi 0, %s32
      %s33 = sphi 0, %s30
      %s34 = sphi 0, %s33
      %s50 = sphi 0, %s34
      %s54 = sphi 0, %s54
      %s56 = sphi 0, %s54
      %s57 = sphi 0, %s56
      %s71 = sphi 0, %s57
      %s75 = sphi 0, %s75
      %s77 = sphi 0, %s75
      %s78 = sphi 0, %s77
      %s92 = sphi 0, %s78
      %s96 = sphi 0, %s96
      %s98 = sphi 0, %s96
      %s99 = sphi 0, %s98
      %s113 = sphi 0, %s99
      %s117 = sphi 0, %s117
      %s119 = sphi 0, %s117
      %s120 = sphi 0, %s119
      %s134 = sphi 0, %s120
      %s138 = sphi 0, %s138
      %s140 = sphi 0, %s138
      %s141 = sphi 0, %s140
      %s155 = sphi 0, %s141
      %s159 = sphi 0, %s159
      %s161 = sphi 0, %s159
      %s162 = sphi 0, %s161
      %s176 = sphi 0, %s162
      %s182 = sphi 0, %s184
      %s185 = sphi 0, %s182
      %s186 = sphi 0, %s185
      %s202 = sphi 0, %s186
    $region4: #{tpu_custom_call.1} parent=1 // loop_header_branch
      %23 = sbr.rel (%p21) target = $region8
    $region5: #{tpu_custom_call.1} parent=1 // loop_body
      %s25 = ssub.s32 %s20, 1
      %s26 = ssub.s32 %s20, 2
      %s27 = sadd.s32 %s20, 1
      %s28 = ssub.s32 %s20, %s27
      %p29 = scmp.eq.s32.totalorder %s28, 0
      %s31 = sadd.s32 %s30, 1
      %s32 = scalar_select %p29, %s30, %s31
      %p35 = pneg %p29
      %p36 = scmp.eq.s32.totalorder %s20, 1
      %p37 = por %p35, %p36
      %p38 = scmp.ne.s32.totalorder %s30, %s33
      %p39 = scmp.eq.s32.totalorder %s20, 0
      %p40 = por %p38, %p39
      %p41 = scmp.ne.s32.totalorder %s30, %s33
      %p42 = scmp.eq.s32.totalorder %s25, 1
      %p43 = por %p41, %p42
      %p44 = scmp.ne.s32.totalorder %s33, %s34
      %p45 = scmp.eq.s32.totalorder %s25, 0
      %p46 = por %p44, %p45
      %p47 = scmp.ne.s32.totalorder %s33, %s34
      %p48 = scmp.eq.s32.totalorder %s26, 1
      %p49 = por %p47, %p48
      %p51 = scmp.ne.s32.totalorder %s34, %s50
      %p52 = scmp.eq.s32.totalorder %s26, 0
      %p53 = por %p51, %p52
      %s55 = sadd.s32 %s54, 1
      %p58 = scmp.eq.s32.totalorder %s20, 1
      %p59 = scmp.ne.s32.totalorder %s54, %s56
      %p60 = scmp.eq.s32.totalorder %s20, 0
      %p61 = por %p59, %p60
      %p62 = scmp.ne.s32.totalorder %s54, %s56
      %p63 = scmp.eq.s32.totalorder %s25, 1
      %p64 = por %p62, %p63
      %p65 = scmp.ne.s32.totalorder %s56, %s57
      %p66 = scmp.eq.s32.totalorder %s25, 0
      %p67 = por %p65, %p66
      %p68 = scmp.ne.s32.totalorder %s56, %s57
      %p69 = scmp.eq.s32.totalorder %s26, 1
      %p70 = por %p68, %p69
      %p72 = scmp.ne.s32.totalorder %s57, %s71
      %p73 = scmp.eq.s32.totalorder %s26, 0
      %p74 = por %p72, %p73
      %s76 = sadd.s32 %s75, 1
      %p79 = scmp.eq.s32.totalorder %s20, 1
      %p80 = scmp.ne.s32.totalorder %s75, %s77
      %p81 = scmp.eq.s32.totalorder %s20, 0
      %p82 = por %p80, %p81
      %p83 = scmp.ne.s32.totalorder %s75, %s77
      %p84 = scmp.eq.s32.totalorder %s25, 1
      %p85 = por %p83, %p84
      %p86 = scmp.ne.s32.totalorder %s77, %s78
      %p87 = scmp.eq.s32.totalorder %s25, 0
      %p88 = por %p86, %p87
      %p89 = scmp.ne.s32.totalorder %s77, %s78
      %p90 = scmp.eq.s32.totalorder %s26, 1
      %p91 = por %p89, %p90
      %p93 = scmp.ne.s32.totalorder %s78, %s92
      %p94 = scmp.eq.s32.totalorder %s26, 0
      %p95 = por %p93, %p94
      %s97 = sadd.s32 %s96, 1
      %p100 = scmp.eq.s32.totalorder %s20, 1
      %p101 = scmp.ne.s32.totalorder %s96, %s98
      %p102 = scmp.eq.s32.totalorder %s20, 0
      %p103 = por %p101, %p102
      %p104 = scmp.ne.s32.totalorder %s96, %s98
      %p105 = scmp.eq.s32.totalorder %s25, 1
      %p106 = por %p104, %p105
      %p107 = scmp.ne.s32.totalorder %s98, %s99
      %p108 = scmp.eq.s32.totalorder %s25, 0
      %p109 = por %p107, %p108
      %p110 = scmp.ne.s32.totalorder %s98, %s99
      %p111 = scmp.eq.s32.totalorder %s26, 1
      %p112 = por %p110, %p111
      %p114 = scmp.ne.s32.totalorder %s99, %s113
      %p115 = scmp.eq.s32.totalorder %s26, 0
      %p116 = por %p114, %p115
      %s118 = sadd.s32 %s117, 1
      %p121 = scmp.eq.s32.totalorder %s20, 1
      %p122 = scmp.ne.s32.totalorder %s117, %s119
      %p123 = scmp.eq.s32.totalorder %s20, 0
      %p124 = por %p122, %p123
      %p125 = scmp.ne.s32.totalorder %s117, %s119
      %p126 = scmp.eq.s32.totalorder %s25, 1
      %p127 = por %p125, %p126
      %p128 = scmp.ne.s32.totalorder %s119, %s120
      %p129 = scmp.eq.s32.totalorder %s25, 0
      %p130 = por %p128, %p129
      %p131 = scmp.ne.s32.totalorder %s119, %s120
      %p132 = scmp.eq.s32.totalorder %s26, 1
      %p133 = por %p131, %p132
      %p135 = scmp.ne.s32.totalorder %s120, %s134
      %p136 = scmp.eq.s32.totalorder %s26, 0
      %p137 = por %p135, %p136
      %s139 = sadd.s32 %s138, 1
      %p142 = scmp.eq.s32.totalorder %s20, 1
      %p143 = scmp.ne.s32.totalorder %s138, %s140
      %p144 = scmp.eq.s32.totalorder %s20, 0
      %p145 = por %p143, %p144
      %p146 = scmp.ne.s32.totalorder %s138, %s140
      %p147 = scmp.eq.s32.totalorder %s25, 1
      %p148 = por %p146, %p147
      %p149 = scmp.ne.s32.totalorder %s140, %s141
      %p150 = scmp.eq.s32.totalorder %s25, 0
      %p151 = por %p149, %p150
      %p152 = scmp.ne.s32.totalorder %s140, %s141
      %p153 = scmp.eq.s32.totalorder %s26, 1
      %p154 = por %p152, %p153
      %p156 = scmp.ne.s32.totalorder %s141, %s155
      %p157 = scmp.eq.s32.totalorder %s26, 0
      %p158 = por %p156, %p157
      %s160 = sadd.s32 %s159, 1
      %p163 = scmp.eq.s32.totalorder %s20, 1
      %p164 = scmp.ne.s32.totalorder %s159, %s161
      %p165 = scmp.eq.s32.totalorder %s20, 0
      %p166 = por %p164, %p165
      %p167 = scmp.ne.s32.totalorder %s159, %s161
      %p168 = scmp.eq.s32.totalorder %s25, 1
      %p169 = por %p167, %p168
      %p170 = scmp.ne.s32.totalorder %s161, %s162
      %p171 = scmp.eq.s32.totalorder %s25, 0
      %p172 = por %p170, %p171
      %p173 = scmp.ne.s32.totalorder %s161, %s162
      %p174 = scmp.eq.s32.totalorder %s26, 1
      %p175 = por %p173, %p174
      %p177 = scmp.ne.s32.totalorder %s162, %s176
      %p178 = scmp.eq.s32.totalorder %s26, 0
      %p179 = por %p177, %p178
      %s180 = ssub.s32 %s20, %s27
      %p181 = scmp.eq.s32.totalorder %s180, 0
      %s183 = sadd.s32 %s182, 1
      %s184 = scalar_select %p181, %s182, %s183
      %p187 = pneg %p181
      %p188 = scmp.eq.s32.totalorder %s20, 1
      %p189 = por %p187, %p188
      %p190 = scmp.ne.s32.totalorder %s182, %s185
      %p191 = scmp.eq.s32.totalorder %s20, 0
      %p192 = por %p190, %p191
      %p193 = scmp.ne.s32.totalorder %s182, %s185
      %p194 = scmp.eq.s32.totalorder %s25, 1
      %p195 = por %p193, %p194
      %p196 = scmp.ne.s32.totalorder %s185, %s186
      %p197 = scmp.eq.s32.totalorder %s25, 0
      %p198 = por %p196, %p197
      %p199 = scmp.ne.s32.totalorder %s185, %s186
      %p200 = scmp.eq.s32.totalorder %s26, 1
      %p201 = por %p199, %p200
      %p203 = scmp.ne.s32.totalorder %s186, %s202
      %p204 = scmp.eq.s32.totalorder %s26, 0
      %p205 = por %p203, %p204
      %p206 = scmp.le.s32.totalorder 1, %s20
      %p207 = scmp.lt.s32.totalorder %s20, 3
      %p208 = pnand %p206, %p207
      %p209 = pneg %p208
      // Predicated region
      $region9: #{tpu_custom_call.1} parent=5 // pred_check
        _
      $region10: #{tpu_custom_call.1} parent=5 // pred_check_branch
        %211 = sbr.rel (%p208) target = $region12
      $region11: #{tpu_custom_call.1} parent=5 // pred_region
        %s212 = ssub.s32 %s20, 1
        // Predicated region
        $region13: #{tpu_custom_call.1} parent=11 // pred_check
          %p213 = pneg %p67
        $region14: #{tpu_custom_call.1} parent=11 // pred_check_branch
          %215 = sbr.rel (%p213) target = $region16
        $region15: #{tpu_custom_call.1} parent=11 // pred_region
          %s217 = ssub.s32 2048, 2048
          %218 = vsyncadd [#allocation6], %s217
          %s219 = sshll.u32 [#allocation5], 4
          %s220 = int_to_ptr.vmem [resolvable:$true] %s219
          %225 = dma.hbm_to_vmem [thread:$0]  %s1, 2048, %s220, [#allocation6], 128, 128, 8
        $region16: #{tpu_custom_call.1} parent=11 // pred_fallthru
          _
        // Predicated region
        $region17: #{tpu_custom_call.1} parent=11 // pred_check
          %p226 = pneg %p88
        $region18: #{tpu_custom_call.1} parent=11 // pred_check_branch
          %228 = sbr.rel (%p226) target = $region20
        $region19: #{tpu_custom_call.1} parent=11 // pred_region
          _
        $region20: #{tpu_custom_call.1} parent=11 // pred_fallthru
          _
        // Predicated region
        $region21: #{tpu_custom_call.1} parent=11 // pred_check
          %p229 = pneg %p109
        $region22: #{tpu_custom_call.1} parent=11 // pred_check_branch
          %231 = sbr.rel (%p229) target = $region24
        $region23: #{tpu_custom_call.1} parent=11 // pred_region
          %s233 = ssub.s32 2048, 2048
          %234 = vsyncadd [#allocation6], %s233
          %s235 = sshll.u32 [#allocation7], 4
          %s236 = int_to_ptr.vmem [resolvable:$true] %s235
          %241 = dma.hbm_to_vmem [thread:$0]  %s3, 2048, %s236, [#allocation6], 128, 128, 8
        $region24: #{tpu_custom_call.1} parent=11 // pred_fallthru
          _
        // Predicated region
        $region25: #{tpu_custom_call.1} parent=11 // pred_check
          %p242 = pneg %p130
        $region26: #{tpu_custom_call.1} parent=11 // pred_check_branch
          %244 = sbr.rel (%p242) target = $region28
        $region27: #{tpu_custom_call.1} parent=11 // pred_region
          _
        $region28: #{tpu_custom_call.1} parent=11 // pred_fallthru
          _
        // Predicated region
        $region29: #{tpu_custom_call.1} parent=11 // pred_check
          %p245 = pneg %p151
        $region30: #{tpu_custom_call.1} parent=11 // pred_check_branch
          %247 = sbr.rel (%p245) target = $region32
        $region31: #{tpu_custom_call.1} parent=11 // pred_region
          _
        $region32: #{tpu_custom_call.1} parent=11 // pred_fallthru
          _
        // Predicated region
        $region33: #{tpu_custom_call.1} parent=11 // pred_check
          %p248 = pneg %p172
        $region34: #{tpu_custom_call.1} parent=11 // pred_check_branch
          %250 = sbr.rel (%p248) target = $region36
        $region35: #{tpu_custom_call.1} parent=11 // pred_region
          _
        $region36: #{tpu_custom_call.1} parent=11 // pred_fallthru
          _
      $region12: #{tpu_custom_call.1} parent=5 // pred_fallthru
        _
      %p251 = scmp.lt.s32.totalorder %s20, 2
      // Predicated region
      $region37: #{tpu_custom_call.1} parent=5 // pred_check
        %p252 = pneg %p251
      $region38: #{tpu_custom_call.1} parent=5 // pred_check_branch
        %254 = sbr.rel (%p252) target = $region40
      $region39: #{tpu_custom_call.1} parent=5 // pred_region
        // Predicated region
        $region41: #{tpu_custom_call.1} parent=39 // pred_check
          %p255 = pneg %p40
        $region42: #{tpu_custom_call.1} parent=39 // pred_check_branch
          %257 = sbr.rel (%p255) target = $region44
        $region43: #{tpu_custom_call.1} parent=39 // pred_region
          %s258 = sand.u32 %s30, 1
          %s259 = scalar_lea.sflag [#allocation3], %s258
          %s260 = sand.u32 %s30, 1
          %s261 = smul.addr %s260, 8
          %s262 = scalar_lea.vmem [#allocation2], %s261
          %s264 = ssub.s32 128, 128
          %265 = vsyncadd %s259, %s264
          %s266 = smul.addr %s20, 128
          %s267 = scalar_lea.hbm %s0, %s266
          %s269 = sshll.u32 %s262, 4
          %s270 = int_to_ptr.vmem [resolvable:$true] %s269
          %272 = dma.hbm_to_vmem [thread:$0]  %s267, 128, %s270, %s259
        $region44: #{tpu_custom_call.1} parent=39 // pred_fallthru
          _
      $region40: #{tpu_custom_call.1} parent=5 // pred_fallthru
        _
      %p273 = scmp.le.s32.totalorder 1, %s20
      %p274 = scmp.lt.s32.totalorder %s20, 3
      %p275 = pnand %p273, %p274
      %p276 = pneg %p275
      // Predicated region
      $region45: #{tpu_custom_call.1} parent=5 // pred_check
        _
      $region46: #{tpu_custom_call.1} parent=5 // pred_check_branch
        %278 = sbr.rel (%p275) target = $region48
      $region47: #{tpu_custom_call.1} parent=5 // pred_region
        %s279 = ssub.s32 %s20, 1
        %s280 = sand.u32 %s33, 1
        %s281 = scalar_lea.sflag [#allocation3], %s280
        %s282 = sand.u32 %s33, 1
        %s283 = smul.addr %s282, 8
        %s284 = scalar_lea.vmem [#allocation2], %s283
        // Predicated region
        $region49: #{tpu_custom_call.1} parent=47 // pred_check
          %p285 = pneg %p46
        $region50: #{tpu_custom_call.1} parent=47 // pred_check_branch
          %287 = sbr.rel (%p285) target = $region52
        $region51: #{tpu_custom_call.1} parent=47 // pred_region
          %288 = dma.done %s281, 128
        $region52: #{tpu_custom_call.1} parent=47 // pred_fallthru
          _
        // Predicated region
        $region53: #{tpu_custom_call.1} parent=47 // pred_check
          %p289 = pneg %p67
        $region54: #{tpu_custom_call.1} parent=47 // pred_check_branch
          %291 = sbr.rel (%p289) target = $region56
        $region55: #{tpu_custom_call.1} parent=47 // pred_region
          %292 = dma.done [#allocation6], 2048
        $region56: #{tpu_custom_call.1} parent=47 // pred_fallthru
          _
        // Predicated region
        $region57: #{tpu_custom_call.1} parent=47 // pred_check
          %p293 = pneg %p109
        $region58: #{tpu_custom_call.1} parent=47 // pred_check_branch
          %295 = sbr.rel (%p293) target = $region60
        $region59: #{tpu_custom_call.1} parent=47 // pred_region
          %296 = dma.done [#allocation6], 2048
        $region60: #{tpu_custom_call.1} parent=47 // pred_fallthru
          _
        %s297 = sand.u32 %s33, 1
        %s298 = scalar_lea.sflag [#allocation3], %s297
        %s299 = sand.u32 %s33, 1
        %s300 = smul.addr %s299, 8
        %s301 = scalar_lea.vmem [#allocation2], %s300
        %p302 = pneg %p46
        %p303 = pneg %p43
        %p304 = pneg %p67
        %p305 = pneg %p64
        %p306 = pneg %p88
        %p307 = pneg %p85
        %p308 = pneg %p109
        %p309 = pneg %p106
        %p310 = pneg %p130
        %p311 = pneg %p127
        %p312 = pneg %p151
        %p313 = pneg %p148
        %p314 = pneg %p172
        %p315 = pneg %p169
        %p316 = pneg %p198
        %p317 = pneg %p195
        %s318 = sand.u32 %s185, 1
        %s319 = scalar_lea.sflag [#allocation4], %s318
        %s320 = sand.u32 %s185, 1
        %s321 = smul.addr %s320, 8
        %s322 = scalar_lea.vmem [#allocation8], %s321
        %v323 = vld [vmem:[%s284] sm:$0xff]
        %v324 = vld [vmem:[#allocation5] sm:$0xff]
        %v325 = vld [vmem:[#allocation5 + $0x8] sm:$0xff]
        %v326 = vld [vmem:[#allocation5 + $0x10] sm:$0xff]
        %v327 = vld [vmem:[#allocation5 + $0x18] sm:$0xff]
        %v328 = vld [vmem:[#allocation5 + $0x20] sm:$0xff]
        %v329 = vld [vmem:[#allocation5 + $0x28] sm:$0xff]
        %v330 = vld [vmem:[#allocation5 + $0x30] sm:$0xff]
        %v331 = vld [vmem:[#allocation5 + $0x38] sm:$0xff]
        %v332 = vld [vmem:[#allocation5 + $0x40] sm:$0xff]
        %v333 = vld [vmem:[#allocation5 + $0x48] sm:$0xff]
        %v334 = vld [vmem:[#allocation5 + $0x50] sm:$0xff]
        %v335 = vld [vmem:[#allocation5 + $0x58] sm:$0xff]
        %v336 = vld [vmem:[#allocation5 + $0x60] sm:$0xff]
        %v337 = vld [vmem:[#allocation5 + $0x68] sm:$0xff]
        %v338 = vld [vmem:[#allocation5 + $0x70] sm:$0xff]
        %v339 = vld [vmem:[#allocation5 + $0x78] sm:$0xff]
        %v340 = vld [vmem:[%s2] sm:$0x1]
        %v342 = vlaneseq
        %v343 = vshrl.u32 %v342, 7
        %v344 = vsub.s32 0, %v343
        %v345 = vrot.slane %v340, %v344
        %347 = vmatprep.subr.mxu0 0.0
        %348 = vmatpush1.msra.mxu0 %v324
        %349 = vmatprep.subr.mxu0 0.0
        %350 = vmatpush1.msra.mxu0 %v325
        %351 = vmatprep.subr.mxu0 0.0
        %352 = vmatpush1.msra.mxu0 %v326
        %353 = vmatprep.subr.mxu0 0.0
        %354 = vmatpush1.msra.mxu0 %v327
        %355 = vmatprep.subr.mxu0 0.0
        %356 = vmatpush1.msra.mxu0 %v328
        %357 = vmatprep.subr.mxu0 0.0
        %358 = vmatpush1.msra.mxu0 %v329
        %359 = vmatprep.subr.mxu0 0.0
        %360 = vmatpush1.msra.mxu0 %v330
        %361 = vmatprep.subr.mxu0 0.0
        %362 = vmatpush1.msra.mxu0 %v331
        %363 = vmatprep.subr.mxu0 0.0
        %364 = vmatpush1.msra.mxu0 %v332
        %365 = vmatprep.subr.mxu0 0.0
        %366 = vmatpush1.msra.mxu0 %v333
        %367 = vmatprep.subr.mxu0 0.0
        %368 = vmatpush1.msra.mxu0 %v334
        %369 = vmatprep.subr.mxu0 0.0
        %370 = vmatpush1.msra.mxu0 %v335
        %371 = vmatprep.subr.mxu0 0.0
        %372 = vmatpush1.msra.mxu0 %v336
        %373 = vmatprep.subr.mxu0 0.0
        %374 = vmatpush1.msra.mxu0 %v337
        %375 = vmatprep.subr.mxu0 0.0
        %376 = vmatpush1.msra.mxu0 %v338
        %377 = vmatprep.subr.mxu0 0.0
        %378 = vmatpush1.msra.mxu0 %v339
        %379 = vmatprep.subr.mxu0 0.0
        %380 = vmatpush1.msra.mxu0 0.0
        %381 = vmatprep.subr.mxu0 0.0
        %382 = vmatpush1.msra.mxu0 0.0
        %383 = vmatprep.subr.mxu0 0.0
        %384 = vmatpush1.msra.mxu0 0.0
        %385 = vmatprep.subr.mxu0 0.0
        %386 = vmatpush1.msra.mxu0 0.0
        %387 = vmatprep.subr.mxu0 0.0
        %388 = vmatpush1.msra.mxu0 0.0
        %389 = vmatprep.subr.mxu0 0.0
        %390 = vmatpush1.msra.mxu0 0.0
        %391 = vmatprep.subr.mxu0 0.0
        %392 = vmatpush1.msra.mxu0 0.0
        %393 = vmatprep.subr.mxu0 0.0
        %394 = vmatpush1.msra.mxu0 0.0
        %395 = vmatprep.subr.mxu0 0.0
        %396 = vmatpush1.msra.mxu0 0.0
        %397 = vmatprep.subr.mxu0 0.0
        %398 = vmatpush1.msra.mxu0 0.0
        %399 = vmatprep.subr.mxu0 0.0
        %400 = vmatpush1.msra.mxu0 0.0
        %401 = vmatprep.subr.mxu0 0.0
        %402 = vmatpush1.msra.mxu0 0.0
        %403 = vmatprep.subr.mxu0 0.0
        %404 = vmatpush1.msra.mxu0 0.0
        %405 = vmatprep.subr.mxu0 0.0
        %406 = vmatpush1.msra.mxu0 0.0
        %407 = vmatprep.subr.mxu0 0.0
        %408 = vmatpush1.msra.mxu0 0.0
        %409 = vmatprep.subr.mxu0 0.0
        %410 = vmatpush1.msra.mxu0 0.0
        %411 = vmatprep.mubr.f32.mxu0 0.0
        %412 = vmatmul.mubr.f32.gmra.mrb[0].mxu0 %v323
        %v413 = vpop.f32.mrb[0].mxu0
        %v414 = vadd.f32 %v345, %v413
        %v415 = vpop.f32.mrb[0].mxu0
        %416 = vdwg.mxu0
        %v417 = vmul.f32 %v414, 0.5
        %v418 = vmul.f32 %v414, 0.044715
        %v419 = vmul.f32 %v418, %v414
        %v420 = vmul.f32 %v419, %v414
        %v421 = vadd.f32 %v414, %v420
        %v422 = vmul.f32 %v421, 0.7978846
        %v423 = vtanh.pop %v422
        %v424 = vadd.f32 %v423, 1.0
        %v425 = vmul.f32 %v417, %v424
        %v426 = vld [vmem:[#allocation7] sm:$0xff]
        %v427 = vld [vmem:[#allocation7 + $0x8] sm:$0xff]
        %v428 = vld [vmem:[#allocation7 + $0x10] sm:$0xff]
        %v429 = vld [vmem:[#allocation7 + $0x18] sm:$0xff]
        %v430 = vld [vmem:[#allocation7 + $0x20] sm:$0xff]
        %v431 = vld [vmem:[#allocation7 + $0x28] sm:$0xff]
        %v432 = vld [vmem:[#allocation7 + $0x30] sm:$0xff]
        %v433 = vld [vmem:[#allocation7 + $0x38] sm:$0xff]
        %v434 = vld [vmem:[#allocation7 + $0x40] sm:$0xff]
        %v435 = vld [vmem:[#allocation7 + $0x48] sm:$0xff]
        %v436 = vld [vmem:[#allocation7 + $0x50] sm:$0xff]
        %v437 = vld [vmem:[#allocation7 + $0x58] sm:$0xff]
        %v438 = vld [vmem:[#allocation7 + $0x60] sm:$0xff]
        %v439 = vld [vmem:[#allocation7 + $0x68] sm:$0xff]
        %v440 = vld [vmem:[#allocation7 + $0x70] sm:$0xff]
        %v441 = vld [vmem:[#allocation7 + $0x78] sm:$0xff]
        %v442 = vld [vmem:[%s4] sm:$0x1]
        %v444 = vlaneseq
        %v445 = vshrl.u32 %v444, 7
        %v446 = vsub.s32 0, %v445
        %v447 = vrot.slane %v442, %v446
        %449 = vmatprep.subr.mxu0 0.0
        %450 = vmatpush1.msra.mxu0 %v426
        %451 = vmatprep.subr.mxu0 0.0
        %452 = vmatpush1.msra.mxu0 %v427
        %453 = vmatprep.subr.mxu0 0.0
        %454 = vmatpush1.msra.mxu0 %v428
        %455 = vmatprep.subr.mxu0 0.0
        %456 = vmatpush1.msra.mxu0 %v429
        %457 = vmatprep.subr.mxu0 0.0
        %458 = vmatpush1.msra.mxu0 %v430
        %459 = vmatprep.subr.mxu0 0.0
        %460 = vmatpush1.msra.mxu0 %v431
        %461 = vmatprep.subr.mxu0 0.0
        %462 = vmatpush1.msra.mxu0 %v432
        %463 = vmatprep.subr.mxu0 0.0
        %464 = vmatpush1.msra.mxu0 %v433
        %465 = vmatprep.subr.mxu0 0.0
        %466 = vmatpush1.msra.mxu0 %v434
        %467 = vmatprep.subr.mxu0 0.0
        %468 = vmatpush1.msra.mxu0 %v435
        %469 = vmatprep.subr.mxu0 0.0
        %470 = vmatpush1.msra.mxu0 %v436
        %471 = vmatprep.subr.mxu0 0.0
        %472 = vmatpush1.msra.mxu0 %v437
        %473 = vmatprep.subr.mxu0 0.0
        %474 = vmatpush1.msra.mxu0 %v438
        %475 = vmatprep.subr.mxu0 0.0
        %476 = vmatpush1.msra.mxu0 %v439
        %477 = vmatprep.subr.mxu0 0.0
        %478 = vmatpush1.msra.mxu0 %v440
        %479 = vmatprep.subr.mxu0 0.0
        %480 = vmatpush1.msra.mxu0 %v441
        %481 = vmatprep.subr.mxu0 0.0
        %482 = vmatpush1.msra.mxu0 0.0
        %483 = vmatprep.subr.mxu0 0.0
        %484 = vmatpush1.msra.mxu0 0.0
        %485 = vmatprep.subr.mxu0 0.0
        %486 = vmatpush1.msra.mxu0 0.0
        %487 = vmatprep.subr.mxu0 0.0
        %488 = vmatpush1.msra.mxu0 0.0
        %489 = vmatprep.subr.mxu0 0.0
        %490 = vmatpush1.msra.mxu0 0.0
        %491 = vmatprep.subr.mxu0 0.0
        %492 = vmatpush1.msra.mxu0 0.0
        %493 = vmatprep.subr.mxu0 0.0
        %494 = vmatpush1.msra.mxu0 0.0
        %495 = vmatprep.subr.mxu0 0.0
        %496 = vmatpush1.msra.mxu0 0.0
        %497 = vmatprep.subr.mxu0 0.0
        %498 = vmatpush1.msra.mxu0 0.0
        %499 = vmatprep.subr.mxu0 0.0
        %500 = vmatpush1.msra.mxu0 0.0
        %501 = vmatprep.subr.mxu0 0.0
        %502 = vmatpush1.msra.mxu0 0.0
        %503 = vmatprep.subr.mxu0 0.0
        %504 = vmatpush1.msra.mxu0 0.0
        %505 = vmatprep.subr.mxu0 0.0
        %506 = vmatpush1.msra.mxu0 0.0
        %507 = vmatprep.subr.mxu0 0.0
        %508 = vmatpush1.msra.mxu0 0.0
        %509 = vmatprep.subr.mxu0 0.0
        %510 = vmatpush1.msra.mxu0 0.0
        %511 = vmatprep.subr.mxu0 0.0
        %512 = vmatpush1.msra.mxu0 0.0
        %513 = vmatprep.mubr.f32.mxu0 0.0
        %514 = vmatmul.mubr.f32.gmra.mrb[0].mxu0 %v425
        %v515 = vpop.f32.mrb[0].mxu0
        %v516 = vadd.f32 %v447, %v515
        %v517 = vpop.f32.mrb[0].mxu0
        %518 = vdwg.mxu0
        %v519 = vadd.f32 %v516, %v323
        %v520 = vlaneseq
        %v521 = vand.u32 %v520, 127
        %vm522 = vcmp.lt.s32.totalorder %v521, 32
        %v523 = vsel %vm522, %v519, 0.0
        %524 = vadd.xlane.f32.xlu0 %v523
        %v525 = vpop.xlane.xlu0 %524
        %v526 = vmul.f32 %v525, 0.03125
        %v527 = vsub.f32 %v523, %v526
        %v528 = vsel %vm522, %v527, 0.0
        %v529 = vmul.f32 %v528, %v528
        %530 = vadd.xlane.f32.xlu0 %v529
        %v531 = vpop.xlane.xlu0 %530
        %v532 = vmul.f32 %v531, 0.03125
        %v533 = vadd.f32 %v532, 1e-05
        %v534 = vrsqrt.pop %v533
        %v535 = vmul.f32 %v528, %v534
        %v536 = vld [vmem:[%s5] sm:$0x1]
        %v538 = vlaneseq
        %v539 = vshrl.u32 %v538, 7
        %v540 = vsub.s32 0, %v539
        %v541 = vrot.slane %v536, %v540
        %v543 = vmul.f32 %v535, %v541
        %v544 = vld [vmem:[%s6] sm:$0x1]
        %v546 = vlaneseq
        %v547 = vshrl.u32 %v546, 7
        %v548 = vsub.s32 0, %v547
        %v549 = vrot.slane %v544, %v548
        %v551 = vadd.f32 %v543, %v549
        %552 = vst [vmem:[%s322] sm:$0xff] %v551
        %s553 = sand.u32 %s185, 1
        %s554 = scalar_lea.sflag [#allocation4], %s553
        %s555 = sand.u32 %s185, 1
        %s556 = smul.addr %s555, 8
        %s557 = scalar_lea.vmem [#allocation8], %s556
        // Predicated region
        $region61: #{tpu_custom_call.1} parent=47 // pred_check
          %p558 = pneg %p195
        $region62: #{tpu_custom_call.1} parent=47 // pred_check_branch
          %560 = sbr.rel (%p558) target = $region64
        $region63: #{tpu_custom_call.1} parent=47 // pred_region
          %s562 = ssub.s32 128, 128
          %563 = vsyncadd %s554, %s562
          %s564 = smul.addr %s25, 128
          %s565 = scalar_lea.hbm %s7, %s564
          %s567 = sshll.u32 %s557, 4
          %s568 = int_to_ptr.vmem [resolvable:$true] %s567
          %570 = dma.vmem_to_hbm [thread:$0]  %s568, 128, %s565, %s554
        $region64: #{tpu_custom_call.1} parent=47 // pred_fallthru
          _
      $region48: #{tpu_custom_call.1} parent=5 // pred_fallthru
        _
      %p571 = scmp.le.s32.totalorder 2, %s20
      // Predicated region
      $region65: #{tpu_custom_call.1} parent=5 // pred_check
        %p572 = pneg %p571
      $region66: #{tpu_custom_call.1} parent=5 // pred_check_branch
        %574 = sbr.rel (%p572) target = $region68
      $region67: #{tpu_custom_call.1} parent=5 // pred_region
        %s575 = ssub.s32 %s20, 2
        // Predicated region
        $region69: #{tpu_custom_call.1} parent=67 // pred_check
          %p576 = pneg %p201
        $region70: #{tpu_custom_call.1} parent=67 // pred_check_branch
          %578 = sbr.rel (%p576) target = $region72
        $region71: #{tpu_custom_call.1} parent=67 // pred_region
          %s579 = sand.u32 %s186, 1
          %s580 = scalar_lea.sflag [#allocation4], %s579
          %s581 = sand.u32 %s186, 1
          %s582 = smul.addr %s581, 8
          %s583 = scalar_lea.vmem [#allocation8], %s582
          %584 = dma.done %s580, 128
        $region72: #{tpu_custom_call.1} parent=67 // pred_fallthru
          _
      $region68: #{tpu_custom_call.1} parent=5 // pred_fallthru
        _
    $region6: #{tpu_custom_call.1} parent=1 // loop_footer
      %s24 = sadd.s32 1, %s20
    $region7: #{tpu_custom_call.1} parent=1 // loop_footer_branch
      %19 = sbr.rel target = $region3
    $region8: #{tpu_custom_call.1} parent=1 // loop_exit
      _
    %585 = vsyncpa [#allocation3], 1
    %s586 = scalar_lea.sflag [#allocation3], 1
    %587 = vsyncpa %s586, 1
    %588 = vsyncpa [#allocation6], 1
    %589 = vsyncpa [#allocation4], 1
    %s590 = scalar_lea.sflag [#allocation4], 1
    %591 = vsyncpa %s590, 1

</llo_original>
